<compile_context>
chip_gen: v5e
topology: v5e:2x2
jax: 0.10.0
libtpu: 0.0.40
codegen_flags: <defaults>
</compile_context>

<pallas_src>
import math

import jax
import jax.numpy as jnp
import numpy as np
from jax.experimental import pallas as pl
from jax.experimental.pallas import tpu as pltpu


# ---------------------------------------------------------------------------
# Kernel 1: squeeze — tiled per-channel spatial sum (reduction accumulator).
# ---------------------------------------------------------------------------
def _pool_sum_kernel(x_ref, sum_ref):
    """x_ref: (C, tp) moving spatial tile; sum_ref: (C, 1) f32 resident acc."""
    @pl.when(pl.program_id(0) == 0)
    def _():
        sum_ref[...] = jnp.zeros_like(sum_ref)

    sum_ref[...] += jnp.sum(x_ref[...].astype(jnp.float32), axis=-1,
                            keepdims=True)


# ---------------------------------------------------------------------------
# Kernel 2: scale — broadcast multiply by the (C, R) gate, lane-dense stores.
# ---------------------------------------------------------------------------
def _scale_kernel(x_ref, gate_ref, o_ref):
    """o[r, c, s] = gate[c, r] * x[c, s] for the current spatial tile.

    x_ref    : (C, tile)    moving spatial tile of the input
    gate_ref : (C, R)       f32 gate, channels on sublanes (constant index map)
    o_ref    : (R, C, tile) current output tile
    """
    n_r = o_ref.shape[0]
    # bf16 VALU exists on v6e/v7x: compute in bf16 for bf16 inputs (halves VPU
    # slot usage, vreg pressure and vld/vst counts); otherwise compute in f32.
    compute_dtype = jnp.bfloat16 if x_ref.dtype == jnp.bfloat16 else jnp.float32
    xt = x_ref[...].astype(compute_dtype)          # no-op cast for f32 inputs
    gate = gate_ref[...].astype(compute_dtype)     # hoisted out of the r-loop
    for r in range(n_r):                           # tiny static unroll over R
        o_ref[r, :, :] = (gate[:, r:r + 1] * xt).astype(o_ref.dtype)


# ---------------------------------------------------------------------------
# Tiling / compiler-parameter helpers.
# ---------------------------------------------------------------------------
def _round_down_128(n):
    return (n // 128) * 128


def _pick_spatial_tile(hw, bytes_per_lane, *, budget_bytes, prefer_multi_step):
    """Largest lane-dense tile dividing hw that fits the VMEM block budget.

    With prefer_multi_step, prefer tiles giving an even number (>= 2) of grid
    steps so v7x can split the store-dominated work across both TensorCores.
    """
    if hw % 128 != 0:
        return hw                                   # full-extent block is always legal
    max_lanes = max(128, _round_down_128(budget_bytes // max(bytes_per_lane, 1)))
    divs = [t for t in range(128, hw + 1, 128) if hw % t == 0 and t <= max_lanes]
    if not divs:
        # TODO(synk): for extremely large C*R even a 128-lane tile overflows the
        # budget; a further split over R/C would be needed there.
        return 128
    if prefer_multi_step:
        even = [t for t in divs if (hw // t) >= 2 and (hw // t) % 2 == 0]
        if even:
            return max(even)
        multi = [t for t in divs if hw // t >= 2]
        if multi:
            return max(multi)
    return max(divs)


def _device_vmem_bytes():
    """Physical VMEM per TensorCore; conservative (v7x) fallback if unknown."""
    try:
        info = pltpu.get_tpu_info()
        cap = getattr(info, "vmem_capacity_bytes", None)
        if cap:
            return int(cap)
    except Exception:
        pass
    return 64 << 20


def _compiler_params(vmem_est, dimension_semantics):
    kw = dict(dimension_semantics=dimension_semantics)
    # Scoped defaults: 16 MiB (v5e) / 32 MiB (v6e, v7x).  Only raise the limit
    # when the estimate needs it, and never above physical VMEM (v7x: 64 MiB).
    if vmem_est > (14 << 20):
        cap = _device_vmem_bytes() - (8 << 20)      # headroom for Mosaic scratch
        kw["vmem_limit_bytes"] = int(min(int(vmem_est * 1.5), cap))
    return pltpu.CompilerParams(**kw)


# ---------------------------------------------------------------------------
# Wrapper.
# ---------------------------------------------------------------------------
def se_spatial(x, l1, l2, *, vmem_block_budget=12 << 20):
    """out = x * sigmoid((avgpool(x) * l1).clamp(0) * l2).reshape(-1, C, 1, 1).

    The reference module's broadcasting only type-checks for batch size 1 and
    its output "batch" dim becomes R = C // ratio; reproduced faithfully.
    Output dtype follows the input dtype.
    """
    B, C, H, W = x.shape
    assert B == 1, "SE gate broadcasting only works for batch size 1"
    R = l1.shape[1]
    assert l1.shape == (C, R) and l2.shape == (C, R)
    assert C % R == 0, "C must be divisible by R = C // ratio"
    HW = H * W

    in_itemsize = jnp.dtype(x.dtype).itemsize
    out_dtype = x.dtype
    out_itemsize = jnp.dtype(out_dtype).itemsize
    x2d = x.reshape(C, HW)

    # ---- Pass 1: squeeze (per-channel spatial sum), tiled reduction. --------
    tp = _pick_spatial_tile(HW, 2 * C * in_itemsize,
                            budget_bytes=vmem_block_budget,
                            prefer_multi_step=False)   # reduction axis is serial
    np_steps = HW // tp
    pool_vmem = 2 * C * tp * in_itemsize + 2 * C * 4
    pool_sum = pl.pallas_call(
        _pool_sum_kernel,
        out_shape=jax.ShapeDtypeStruct((C, 1), jnp.float32),
        grid=(np_steps,),
        in_specs=[pl.BlockSpec((C, tp), lambda j: (0, j))],   # moving tile
        out_specs=pl.BlockSpec((C, 1), lambda j: (0, 0)),     # resident accumulator
        compiler_params=_compiler_params(pool_vmem, ("arbitrary",)),
        cost_estimate=pl.CostEstimate(
            flops=int(C * HW),
            transcendentals=0,
            bytes_accessed=int(C * HW * in_itemsize + C * 4)),
    )(x2d)

    # ---- Excitation + relabel: tiny O(C*R) math in plain JAX. ---------------
    pool = pool_sum * (1.0 / HW)                                # (C, 1) f32
    f1 = jnp.maximum(pool * l1.astype(jnp.float32), 0.0)        # (C, R)
    f2 = jax.nn.sigmoid(f1 * l2.astype(jnp.float32))            # (C, R)
    # Reference gate g[r, c] = f2.reshape(-1)[r*C + c]; keep channels on
    # sublanes for the scale kernel: gate_cr[c, r] = g[r, c].
    gate_cr = f2.reshape(R, C).T                                # (C, R) f32

    # ---- Pass 2: scale — lane-dense broadcast multiply over spatial tiles. --
    per_lane = 2 * C * in_itemsize + 2 * R * C * out_itemsize   # dbl-buffered in+out
    tile = _pick_spatial_tile(HW, per_lane, budget_bytes=vmem_block_budget,
                              prefer_multi_step=True)           # v7x: 2-TC store split
    nt = HW // tile
    scale_vmem = per_lane * tile + 2 * C * R * 4
    out = pl.pallas_call(
        _scale_kernel,
        out_shape=jax.ShapeDtypeStruct((R, C, HW), out_dtype),
        grid=(nt,),
        in_specs=[
            pl.BlockSpec((C, tile), lambda j: (0, j)),   # x: moving tile, O(tile) VMEM
            pl.BlockSpec((C, R), lambda j: (0, 0)),      # gate: tiny, resident
        ],
        out_specs=pl.BlockSpec((R, C, tile), lambda j: (0, 0, j)),
        compiler_params=_compiler_params(scale_vmem, ("parallel",)),
        cost_estimate=pl.CostEstimate(
            flops=int(R * C * HW),
            transcendentals=0,
            bytes_accessed=int(C * HW * in_itemsize + C * R * 4
                               + R * C * HW * out_itemsize)),
    )(x2d, gate_cr)

    return out.reshape(R, C, H, W)


def se_spatial_ref(x, l1, l2):
    """Pure-JAX reference mirroring the PyTorch forward (B == 1)."""
    B, C, H, W = x.shape
    pool = jnp.mean(x, axis=(2, 3)).reshape(-1, 1)
    f1 = jnp.maximum(pool * l1, 0.0)
    f2 = jax.nn.sigmoid(f1 * l2)
    return x * f2.reshape(-1, C, 1, 1)


if __name__ == "__main__":
    C, ratio, H, W = 32, 8, 16, 16
    R = C // ratio
    key = jax.random.PRNGKey(0)
    k1, k2, kx = jax.random.split(key, 3)
    # Deterministic parameter init matching the module's shapes/scales.
    l1 = jnp.clip(jax.random.normal(k1, (C, R), dtype=jnp.float32),
                  -2.0, 2.0) * math.sqrt(2.0 / C)
    l2 = jnp.clip(jax.random.normal(k2, (C, R), dtype=jnp.float32),
                  -2.0, 2.0) * math.sqrt(2.0 * ratio / C)
    x = jax.random.normal(kx, (1, C, H, W), dtype=jnp.float32)

    # f32 path: tight tolerance against the pure-JAX reference.
    out = jax.block_until_ready(se_spatial(x, l1, l2))
    ref = jax.block_until_ready(se_spatial_ref(x, l1, l2))
    assert out.shape == ref.shape == (R, C, H, W)
    np.testing.assert_allclose(np.asarray(out), np.asarray(ref),
                               rtol=1e-5, atol=1e-5)

    # bf16 path (exercises the low-precision compute branch): output dtype
    # follows the input dtype, so compare loosely against the f32 reference.
    x_bf16 = x.astype(jnp.bfloat16)
    out_bf16 = jax.block_until_ready(se_spatial(x_bf16, l1, l2))
    ref_bf16 = jax.block_until_ready(
        se_spatial_ref(x_bf16.astype(jnp.float32), l1, l2))
    assert out_bf16.dtype == jnp.bfloat16
    np.testing.assert_allclose(np.asarray(out_bf16.astype(jnp.float32)),
                               np.asarray(ref_bf16), rtol=5e-2, atol=5e-2)

    print("KERNEL_OK")
</pallas_src>

<mosaic_0001>
module attributes {stable_mosaic.version = 11 : i64} {
  func.func @_pool_sum_kernel(%arg0: i32, %arg1: memref<32x256xf32, #tpu.memory_space<vmem>>, %arg2: memref<32x1xf32, #tpu.memory_space<vmem>>) attributes {dimension_semantics = [#tpu.dimension_semantics<arbitrary>], iteration_bounds = array<i64: 1>, scalar_prefetch = 0 : i64, scratch_operands = 0 : i64, tpu.core_type = #tpu.core_type<tc>, window_params = [{transform_indices = @transform_0, window_bounds = array<i64: 32, 256>}, {pipeline_mode = #tpu.pipeline_mode<synchronous>, transform_indices = @transform_1, window_bounds = array<i64: 32, 1>}]} {
    %c0_i32 = arith.constant 0 : i32
    %0 = arith.cmpi eq, %arg0, %c0_i32 : i32
    %1 = arith.extui %0 : i1 to i32
    %c0_i32_0 = arith.constant 0 : i32
    %2 = arith.cmpi ne, %1, %c0_i32_0 : i32
    scf.if %2 {
      %cst_6 = arith.constant 0.000000e+00 : f32
      %9 = vector.broadcast %cst_6 : f32 to vector<32x1xf32>
      %c0_7 = arith.constant 0 : index
      %c0_8 = arith.constant 0 : index
      %10 = vector.load %arg2[%c0_7, %c0_8] : memref<32x1xf32, #tpu.memory_space<vmem>>, vector<32x1xf32>
      tpu.vector_store %arg2[%c0_7, %c0_8], %9 {strides = array<i32>} : memref<32x1xf32, #tpu.memory_space<vmem>>, vector<32x1xf32>,
    } else {
    }
    %c0 = arith.constant 0 : index
    %c0_1 = arith.constant 0 : index
    %3 = vector.load %arg2[%c0, %c0_1] : memref<32x1xf32, #tpu.memory_space<vmem>>, vector<32x1xf32>
    %c0_2 = arith.constant 0 : index
    %c0_3 = arith.constant 0 : index
    %4 = vector.load %arg1[%c0_2, %c0_3] : memref<32x256xf32, #tpu.memory_space<vmem>>, vector<32x256xf32>
    %cst = arith.constant dense<0.000000e+00> : vector<32xf32>
    %5 = vector.multi_reduction <add>, %4, %cst [1] : vector<32x256xf32> to vector<32xf32>
    %6 = vector.shape_cast %5 : vector<32xf32> to vector<32x1xf32>
    %7 = arith.addf %3, %6 : vector<32x1xf32>
    %c0_4 = arith.constant 0 : index
    %c0_5 = arith.constant 0 : index
    %8 = vector.load %arg2[%c0_4, %c0_5] : memref<32x1xf32, #tpu.memory_space<vmem>>, vector<32x1xf32>
    tpu.vector_store %arg2[%c0_4, %c0_5], %7 {strides = array<i32>} : memref<32x1xf32, #tpu.memory_space<vmem>>, vector<32x1xf32>,
    return
  }
  func.func @transform_0(%arg0: i32) -> (i32, i32) {
    %c0_i32 = arith.constant 0 : i32
    %c0_i32_0 = arith.constant 0 : i32
    return %c0_i32, %arg0 : i32, i32
  }
  func.func @transform_1(%arg0: i32) -> (i32, i32) {
    %c0_i32 = arith.constant 0 : i32
    %c0_i32_0 = arith.constant 0 : i32
    %c0_i32_1 = arith.constant 0 : i32
    return %c0_i32, %c0_i32_0 : i32, i32
  }
}

</mosaic_0001>

<llo_original>
// kernel: tpu_custom_call.1
$region0: #{tpu_custom_call.1}
  #allocation0 [shape = 'u32[]', space=smem, size = 0x4, offset = 0x4, fixed_abs, tag = 'smem constant byte address 0x4 - core index']
  #allocation1 [shape = 'u32[72,128]{1,0:T(1,128)}', space=vmem, size = 0x9000, scoped, tag = 'internal scratch']
  %s0 = inlined_call_operand.hbm [shape: f32[32,256], index: 0, kind: input, shape index: {}]
  %s1 = inlined_call_operand.vmem [shape: f32[32,1], index: 1, kind: output, shape index: {}]
  %s2 = sld [smem:[#allocation0]]
  $region22: #{tpu_custom_call.1} parent=0
    _
  %s4 = ssub.s32 1, %s2
  %s5 = scalar_select 0, %s4, %s2
  $region1: #{tpu_custom_call.1} parent=0
    #allocation2 [shape = 'u8[32768]{0}', space=vmem, size = 0x8000, scoped, tag = 'input window, operand 0, single buffered']
    #allocation3 [shape = 's32[1]{0}', space=sflag, size = 0x4, scoped, tag = 'scoped memory for tpu_custom_call.1']
    %6 = vsyncpa [#allocation3], 0
    // Predicated region
    $region2: #{tpu_custom_call.1} parent=1 // pred_check
      _
    $region3: #{tpu_custom_call.1} parent=1 // pred_check_branch
      %8 = sbr.rel (0) target = $region5
    $region4: #{tpu_custom_call.1} parent=1 // pred_region
      %10 = vsyncadd [#allocation3], 0
      %s11 = sshll.u32 %s0, 4
      %s12 = int_to_ptr.hbm [resolvable:$true] %s11
      %s13 = sshll.u32 [#allocation2], 4
      %s14 = int_to_ptr.vmem [resolvable:$true] %s13
      %19 = dma.hbm_to_vmem [thread:$0]  %s12, 1024, %s14, [#allocation3], 256, 256, 16
    $region5: #{tpu_custom_call.1} parent=1 // pred_fallthru
      _
    // Predicated region
    $region6: #{tpu_custom_call.1} parent=1 // pred_check
      _
    $region7: #{tpu_custom_call.1} parent=1 // pred_check_branch
      %21 = sbr.rel (0) target = $region9
    $region8: #{tpu_custom_call.1} parent=1 // pred_region
      %23 = dma.done [#allocation3], 1024
    $region9: #{tpu_custom_call.1} parent=1 // pred_fallthru
      _
    %p24 = scmp.eq.s32.totalorder 0, 0
    // Predicated region
    $region10: #{tpu_custom_call.1} parent=1 // pred_check
      %p25 = pneg %p24
    $region11: #{tpu_custom_call.1} parent=1 // pred_check_branch
      %27 = sbr.rel (%p25) target = $region13
    $region12: #{tpu_custom_call.1} parent=1 // pred_region
      %vm28 = vcmask 7168
      %29 = vst.msk [vmem:[%s1] sm:$0xff] %vm28, 0.0
      %30 = vst.msk [vmem:[%s1 + $0x8] sm:$0xff] %vm28, 0.0
      %31 = vst.msk [vmem:[%s1 + $0x10] sm:$0xff] %vm28, 0.0
      %32 = vst.msk [vmem:[%s1 + $0x18] sm:$0xff] %vm28, 0.0
    $region13: #{tpu_custom_call.1} parent=1 // pred_fallthru
      _
    %v33 = vld [vmem:[%s1] sm:$0xff]
    %v34 = vld [vmem:[%s1 + $0x8] sm:$0xff]
    %v35 = vld [vmem:[%s1 + $0x10] sm:$0xff]
    %v36 = vld [vmem:[%s1 + $0x18] sm:$0xff]
    %v37 = vld [vmem:[#allocation2] sm:$0xff]
    %v38 = vld [vmem:[#allocation2 + $0x8] sm:$0xff]
    %v39 = vld [vmem:[#allocation2 + $0x10] sm:$0xff]
    %v40 = vld [vmem:[#allocation2 + $0x18] sm:$0xff]
    %v41 = vld [vmem:[#allocation2 + $0x20] sm:$0xff]
    %v42 = vld [vmem:[#allocation2 + $0x28] sm:$0xff]
    %v43 = vld [vmem:[#allocation2 + $0x30] sm:$0xff]
    %v44 = vld [vmem:[#allocation2 + $0x38] sm:$0xff]
    %v45 = vadd.f32 %v37, %v38
    %46 = vadd.xlane.f32.xlu0 %v45
    %v47 = vpop.xlane.xlu0 %46
    %v48 = vadd.f32 %v39, %v40
    %49 = vadd.xlane.f32.xlu0 %v48
    %v50 = vpop.xlane.xlu0 %49
    %v51 = vadd.f32 %v41, %v42
    %52 = vadd.xlane.f32.xlu0 %v51
    %v53 = vpop.xlane.xlu0 %52
    %v54 = vadd.f32 %v43, %v44
    %55 = vadd.xlane.f32.xlu0 %v54
    %v56 = vpop.xlane.xlu0 %55
    %v57 = vadd.f32 %v33, %v47
    %v58 = vadd.f32 %v34, %v50
    %v59 = vadd.f32 %v35, %v53
    %v60 = vadd.f32 %v36, %v56
    %vm61 = vcmask 7168
    %62 = vst.msk [vmem:[%s1] sm:$0xff] %vm61, %v57
    %63 = vst.msk [vmem:[%s1 + $0x8] sm:$0xff] %vm61, %v58
    %64 = vst.msk [vmem:[%s1 + $0x10] sm:$0xff] %vm61, %v59
    %65 = vst.msk [vmem:[%s1 + $0x18] sm:$0xff] %vm61, %v60
    // Predicated region
    $region14: #{tpu_custom_call.1} parent=1 // pred_check
      _
    $region15: #{tpu_custom_call.1} parent=1 // pred_check_branch
      %67 = sbr.rel (0) target = $region17
    $region16: #{tpu_custom_call.1} parent=1 // pred_region
      _
    $region17: #{tpu_custom_call.1} parent=1 // pred_fallthru
      _
    // Predicated region
    $region18: #{tpu_custom_call.1} parent=1 // pred_check
      _
    $region19: #{tpu_custom_call.1} parent=1 // pred_check_branch
      %69 = sbr.rel (0) target = $region21
    $region20: #{tpu_custom_call.1} parent=1 // pred_region
      _
    $region21: #{tpu_custom_call.1} parent=1 // pred_fallthru
      _
    %70 = vsyncpa [#allocation3], 1

</llo_original>
